<compile_context>
chip_gen: v7x
topology: tpu7x:2x2x1
jax: 0.10.0
libtpu: 0.0.40
codegen_flags: <defaults>
</compile_context>

<pallas_src>
from functools import partial

import numpy as np
import jax
import jax.numpy as jnp
from jax.experimental import pallas as pl
from jax.experimental.pallas import tpu as pltpu


# ----------------------------- Pallas kernel -------------------------------

def _lora_kernel(*refs, r, use_rank1, fuse_base):
    """One row tile: out = ((x @ A^T) @ (B^T * scaling)) [+ base].

    refs (in order):
      x_ref:    (TM, D)  activation tile
      a_t_ref:  (D, r)   lora_a pre-transposed (VMEM-resident)
      b_ref:    (r, D)   lora_b pre-transposed, scaling folded in (resident)
      base_ref: (TM, D)  optional frozen-layer output to add (if fuse_base)
      o_ref:    (TM, D)  output tile
    """
    if fuse_base:
        x_ref, a_t_ref, b_ref, base_ref, o_ref = refs
    else:
        x_ref, a_t_ref, b_ref, o_ref = refs
        base_ref = None

    x = x_ref[...]
    # Down-projection (contraction over D) on the MXU, f32 accumulation.
    xa = jnp.dot(x, a_t_ref[...], preferred_element_type=jnp.float32)   # (TM, r)

    if use_rank1:
        # Up-projection as r unrolled rank-1 VPU updates.  The MXU would pad
        # the K=r contraction to 128/256, wasting >90% of every push; the VPU
        # form is ~r*TM*D/1024 vregs and hides under the streaming DMA.
        # b already carries alpha/r (folded on host); up-cast once, keep the
        # whole accumulation in f32 (explicit precision choice).
        b = b_ref[...].astype(jnp.float32)                               # (r, D)
        out = xa[:, 0:1] * b[0:1, :]
        for k in range(1, r):
            out = out + xa[:, k:k + 1] * b[k:k + 1, :]
    else:
        # Large-r fallback: plain MXU matmul, f32 accumulator kept in f32.
        out = jnp.dot(xa, b_ref[...].astype(jnp.float32),
                      preferred_element_type=jnp.float32)

    if fuse_base:
        out = out + base_ref[...].astype(jnp.float32)

    o_ref[...] = out.astype(o_ref.dtype)


# ----------------------------- VMEM sizing ----------------------------------

_VMEM_TILE_BUDGET = 44 * 1024 * 1024   # target working set (all generations)
_VMEM_LIMIT_CAP = 48 * 1024 * 1024     # stays well under v7x's 64 MiB physical


def _vmem_estimate(tm, D, r, x_dtype, a_dtype, b_dtype, out_dtype, fuse_base):
    """Rough per-call VMEM working set (double-buffered blocks + f32 temps)."""
    xb = jnp.dtype(x_dtype).itemsize
    ab = jnp.dtype(a_dtype).itemsize
    bb = jnp.dtype(b_dtype).itemsize
    ob = jnp.dtype(out_dtype).itemsize
    r_lanes = max(r, 128)   # lane padding of the (D, r) A^T block
    r_sub = max(r, 8)       # sublane padding of the (r, D) B block
    n = 2 * tm * D * xb                 # x, double buffered
    n += 2 * tm * D * ob                # out, double buffered
    if fuse_base:
        n += 2 * tm * D * xb            # base, double buffered
    n += 2 * D * r_lanes * ab           # A^T
    n += 2 * r_sub * D * bb             # B (scaled)
    n += tm * D * 4 + tm * 128 * 4      # f32 temporaries (out acc, xa)
    return n


# ------------------------------- wrapper ------------------------------------

def lora_forward(x, lora_a, lora_b, alpha=1, r=None, *, base=None,
                 block_rows=1024):
    """Pallas implementation of LoRA.forward for x of shape (..., idim).

    If `base` (same shape as x) is given, the kernel also fuses the
    base-layer add: returns base + lora(x).
    """
    if r is None:
        r = lora_a.shape[0]
    scaling = float(alpha) / float(r)

    orig_shape = x.shape
    D = orig_shape[-1]
    M = int(np.prod(orig_shape[:-1])) if len(orig_shape) > 1 else 1
    x2 = x.reshape(M, D)

    fuse_base = base is not None
    base2 = base.reshape(M, D) if fuse_base else None

    # One-time host-side prep:
    #  * transpose A and cast to the activation dtype (single-pass bf16 MXU
    #    when activations are bf16; no in-kernel relayout),
    #  * fold the alpha/r scaling into B^T (removes the epilogue multiply).
    a_t = lora_a.T.astype(x.dtype)                       # (D, r)
    b_s = (lora_b.T * scaling)                           # (r, D), tiny

    use_rank1 = r <= 16

    # Dtype-aware row alignment: packed dtypes need 16/32-row multiples.
    itemsize = jnp.dtype(x.dtype).itemsize
    row_align = {4: 8, 2: 16, 1: 32}.get(itemsize, 8)

    if M <= row_align:
        tm = M
    else:
        tm = min(block_rows, M)
        tm = max(row_align, (tm // row_align) * row_align)
        # Keep >= 2 row blocks so v7x's two TensorCores both get work on the
        # "parallel" grid axis (neutral on single-TC v5e/v6e).
        if tm >= M and M >= 2 * row_align:
            half = -(-M // 2)
            tm = ((half + row_align - 1) // row_align) * row_align

    # Shrink tm until the working set fits the VMEM budget (matters on v7x's
    # 64 MiB VMEM and v5e's 16 MiB scoped default).
    while tm > row_align and _vmem_estimate(
            tm, D, r, x.dtype, a_t.dtype, b_s.dtype, x.dtype,
            fuse_base) > _VMEM_TILE_BUDGET:
        tm = max(row_align, ((tm // 2) // row_align) * row_align)

    est = _vmem_estimate(tm, D, r, x.dtype, a_t.dtype, b_s.dtype, x.dtype,
                         fuse_base)
    vmem_limit = int(min(max(2 * est, 32 * 1024 * 1024), _VMEM_LIMIT_CAP))

    grid = (pl.cdiv(M, tm),)

    in_specs = [
        pl.BlockSpec((tm, D), lambda i: (i, 0)),   # activations: tiled, pipelined
        pl.BlockSpec((D, r), lambda i: (0, 0)),    # A^T: VMEM-resident
        pl.BlockSpec((r, D), lambda i: (0, 0)),    # B^T * scaling: VMEM-resident
    ]
    args = [x2, a_t, b_s]
    if fuse_base:
        in_specs.append(pl.BlockSpec((tm, D), lambda i: (i, 0)))
        args.append(base2)

    out2 = pl.pallas_call(
        partial(_lora_kernel, r=r, use_rank1=use_rank1, fuse_base=fuse_base),
        grid=grid,
        in_specs=in_specs,
        out_specs=pl.BlockSpec((tm, D), lambda i: (i, 0)),
        out_shape=jax.ShapeDtypeStruct((M, D), x.dtype),
        compiler_params=pltpu.CompilerParams(
            dimension_semantics=("parallel",),
            vmem_limit_bytes=vmem_limit),
    )(*args)

    return out2.reshape(orig_shape)


# ------------------------------ reference ------------------------------------

def reference_lora(x, lora_a, lora_b, alpha, r):
    """Plain numpy mirror of the PyTorch forward."""
    x = np.asarray(x, dtype=np.float32)
    a = np.asarray(lora_a, dtype=np.float32)
    b = np.asarray(lora_b, dtype=np.float32)
    return (x @ a.T) @ b.T * (float(alpha) / float(r))


# --------------------------------- main ---------------------------------------

if __name__ == "__main__":
    # Small shapes consistent with the module: batch=2, seq=8, idim=32, r=4.
    B, T, D, R = 2, 8, 32, 4
    alpha = 1

    key = jax.random.PRNGKey(0)
    kx, ka, kb, kx2, ka2, kb2, kbase = jax.random.split(key, 7)

    x = jax.random.normal(kx, (B, T, D), jnp.float32)
    lora_a = jax.random.normal(ka, (R, D), jnp.float32) / np.sqrt(D)
    # NOTE: the PyTorch module initializes lora_b to zeros (output would be
    # identically 0); use random values so the correctness check is non-trivial.
    lora_b = jax.random.normal(kb, (D, R), jnp.float32) / np.sqrt(R)

    out = jax.block_until_ready(lora_forward(x, lora_a, lora_b, alpha=alpha, r=R))
    ref = reference_lora(x, lora_a, lora_b, alpha, R)
    assert out.shape == (B, T, D)
    assert np.allclose(np.asarray(out), ref, atol=1e-4, rtol=1e-4)

    # Fused base-layer add: out = base + lora(x).
    base = jax.random.normal(kbase, (B, T, D), jnp.float32)
    out_fused = jax.block_until_ready(
        lora_forward(x, lora_a, lora_b, alpha=alpha, r=R, base=base))
    assert np.allclose(np.asarray(out_fused), np.asarray(base) + ref,
                       atol=1e-4, rtol=1e-4)

    # Multi-block row grid with lane-dense D=128 (M = 4*256 = 1024 rows).
    B2, T2, D2 = 4, 256, 128
    x_big = jax.random.normal(kx2, (B2, T2, D2), jnp.float32)
    a_big = jax.random.normal(ka2, (R, D2), jnp.float32) / np.sqrt(D2)
    b_big = jax.random.normal(kb2, (D2, R), jnp.float32) / np.sqrt(R)

    out_big = jax.block_until_ready(
        lora_forward(x_big, a_big, b_big, alpha=alpha, r=R))
    ref_big = reference_lora(x_big, a_big, b_big, alpha, R)
    assert out_big.shape == (B2, T2, D2)
    assert np.allclose(np.asarray(out_big), ref_big, atol=1e-3, rtol=1e-3)

    # bf16 activations/weights (single-pass MXU down-projection, f32 accumulate).
    out_bf16 = jax.block_until_ready(
        lora_forward(x_big.astype(jnp.bfloat16), a_big.astype(jnp.bfloat16),
                     b_big, alpha=alpha, r=R))
    assert out_bf16.dtype == jnp.bfloat16
    assert np.allclose(np.asarray(out_bf16, dtype=np.float32), ref_big,
                       atol=5e-2, rtol=5e-2)

    print("KERNEL_OK")
</pallas_src>

<mosaic_0001>
module attributes {stable_mosaic.version = 11 : i64} {
  func.func @_lora_kernel(%arg0: i32, %arg1: memref<8x32xf32, #tpu.memory_space<vmem>>, %arg2: memref<32x4xf32, #tpu.memory_space<vmem>>, %arg3: memref<4x32xf32, #tpu.memory_space<vmem>>, %arg4: memref<8x32xf32, #tpu.memory_space<vmem>>) attributes {dimension_semantics = [#tpu.dimension_semantics<parallel>], iteration_bounds = array<i64: 2>, scalar_prefetch = 0 : i64, scratch_operands = 0 : i64, tpu.core_type = #tpu.core_type<tc>, window_params = [{transform_indices = @transform_0, window_bounds = array<i64: 8, 32>}, {pipeline_mode = #tpu.pipeline_mode<synchronous>, transform_indices = @transform_1, window_bounds = array<i64: 32, 4>}, {pipeline_mode = #tpu.pipeline_mode<synchronous>, transform_indices = @transform_2, window_bounds = array<i64: 4, 32>}, {transform_indices = @transform_3, window_bounds = array<i64: 8, 32>}]} {
    %c0 = arith.constant 0 : index
    %c0_0 = arith.constant 0 : index
    %0 = vector.load %arg1[%c0, %c0_0] : memref<8x32xf32, #tpu.memory_space<vmem>>, vector<8x32xf32>
    %c0_1 = arith.constant 0 : index
    %c0_2 = arith.constant 0 : index
    %1 = vector.load %arg2[%c0_1, %c0_2] : memref<32x4xf32, #tpu.memory_space<vmem>>, vector<32x4xf32>
    %cst = arith.constant dense<0.000000e+00> : vector<8x4xf32>
    %2 = tpu.matmul %0, %1, %cst {dimension_numbers = #tpu.dot_dimension_numbers<[1], [0], [0], [1], [0, 0, 1, 1], [], []>} : vector<8x32xf32>, vector<32x4xf32>, vector<8x4xf32> -> vector<8x4xf32>
    %c0_3 = arith.constant 0 : index
    %c0_4 = arith.constant 0 : index
    %3 = vector.load %arg3[%c0_3, %c0_4] : memref<4x32xf32, #tpu.memory_space<vmem>>, vector<4x32xf32>
    %4 = vector.extract_strided_slice %2 {offsets = [0, 0], sizes = [8, 1], strides = [1, 1]} : vector<8x4xf32> to vector<8x1xf32>
    %5 = vector.extract_strided_slice %3 {offsets = [0, 0], sizes = [1, 32], strides = [1, 1]} : vector<4x32xf32> to vector<1x32xf32>
    %6 = vector.broadcast %4 : vector<8x1xf32> to vector<8x32xf32>
    %7 = vector.broadcast %5 : vector<1x32xf32> to vector<8x32xf32>
    %8 = arith.mulf %6, %7 : vector<8x32xf32>
    %9 = vector.extract_strided_slice %2 {offsets = [0, 1], sizes = [8, 1], strides = [1, 1]} : vector<8x4xf32> to vector<8x1xf32>
    %10 = vector.extract_strided_slice %3 {offsets = [1, 0], sizes = [1, 32], strides = [1, 1]} : vector<4x32xf32> to vector<1x32xf32>
    %11 = vector.broadcast %9 : vector<8x1xf32> to vector<8x32xf32>
    %12 = vector.broadcast %10 : vector<1x32xf32> to vector<8x32xf32>
    %13 = arith.mulf %11, %12 : vector<8x32xf32>
    %14 = arith.addf %8, %13 : vector<8x32xf32>
    %15 = vector.extract_strided_slice %2 {offsets = [0, 2], sizes = [8, 1], strides = [1, 1]} : vector<8x4xf32> to vector<8x1xf32>
    %16 = vector.extract_strided_slice %3 {offsets = [2, 0], sizes = [1, 32], strides = [1, 1]} : vector<4x32xf32> to vector<1x32xf32>
    %17 = vector.broadcast %15 : vector<8x1xf32> to vector<8x32xf32>
    %18 = vector.broadcast %16 : vector<1x32xf32> to vector<8x32xf32>
    %19 = arith.mulf %17, %18 : vector<8x32xf32>
    %20 = arith.addf %14, %19 : vector<8x32xf32>
    %21 = vector.extract_strided_slice %2 {offsets = [0, 3], sizes = [8, 1], strides = [1, 1]} : vector<8x4xf32> to vector<8x1xf32>
    %22 = vector.extract_strided_slice %3 {offsets = [3, 0], sizes = [1, 32], strides = [1, 1]} : vector<4x32xf32> to vector<1x32xf32>
    %23 = vector.broadcast %21 : vector<8x1xf32> to vector<8x32xf32>
    %24 = vector.broadcast %22 : vector<1x32xf32> to vector<8x32xf32>
    %25 = arith.mulf %23, %24 : vector<8x32xf32>
    %26 = arith.addf %20, %25 : vector<8x32xf32>
    %c0_5 = arith.constant 0 : index
    %c0_6 = arith.constant 0 : index
    %27 = vector.load %arg4[%c0_5, %c0_6] : memref<8x32xf32, #tpu.memory_space<vmem>>, vector<8x32xf32>
    tpu.vector_store %arg4[%c0_5, %c0_6], %26 {strides = array<i32>} : memref<8x32xf32, #tpu.memory_space<vmem>>, vector<8x32xf32>,
    return
  }
  func.func @transform_0(%arg0: i32) -> (i32, i32) {
    %c0_i32 = arith.constant 0 : i32
    %c0_i32_0 = arith.constant 0 : i32
    return %arg0, %c0_i32 : i32, i32
  }
  func.func @transform_1(%arg0: i32) -> (i32, i32) {
    %c0_i32 = arith.constant 0 : i32
    %c0_i32_0 = arith.constant 0 : i32
    %c0_i32_1 = arith.constant 0 : i32
    return %c0_i32, %c0_i32_0 : i32, i32
  }
  func.func @transform_2(%arg0: i32) -> (i32, i32) {
    %c0_i32 = arith.constant 0 : i32
    %c0_i32_0 = arith.constant 0 : i32
    %c0_i32_1 = arith.constant 0 : i32
    return %c0_i32, %c0_i32_0 : i32, i32
  }
  func.func @transform_3(%arg0: i32) -> (i32, i32) {
    %c0_i32 = arith.constant 0 : i32
    %c0_i32_0 = arith.constant 0 : i32
    return %arg0, %c0_i32 : i32, i32
  }
}

</mosaic_0001>

<llo_original>
// kernel: tpu_custom_call.1
$region0: #{tpu_custom_call.1}
  #allocation0 [shape = 'u32[]', space=smem, size = 0x4, offset = 0x4, fixed_abs, tag = 'smem constant byte address 0x4 - core index']
  #allocation1 [shape = 'u32[144,128]{1,0:T(1,128)}', space=vmem, size = 0x12000, scoped, tag = 'internal scratch']
  %s0 = inlined_call_operand.vmem [shape: f32[16,32], index: 0, kind: input, shape index: {}]
  %s1 = inlined_call_operand.vmem [shape: f32[32,4], index: 1, kind: input, shape index: {}]
  %s2 = inlined_call_operand.vmem [shape: f32[4,32], index: 2, kind: input, shape index: {}]
  %s3 = inlined_call_operand.hbm [shape: f32[16,32], index: 3, kind: output, shape index: {}]
  %s4 = sld [smem:[#allocation0]]
  $region45: #{tpu_custom_call.1} parent=0
    _
  %s6 = ssub.s32 1, %s4
  %s7 = scalar_select 0, %s6, %s4
  $region1: #{tpu_custom_call.1} parent=0
    #allocation2 [shape = 'u8[8192]{0}', space=vmem, size = 0x2000, scoped, tag = 'output window, operand 0']
    #allocation3 [shape = 's32[2]{0}', space=sflag, size = 0x8, scoped, tag = 'scoped memory for tpu_custom_call.1']
    %8 = vsyncpa [#allocation3], 0
    %s9 = scalar_lea.sflag [#allocation3], 1
    %10 = vsyncpa %s9, 0
    loop: start=0, step=1, limit=4
    $region2: #{tpu_custom_call.1} parent=1 // loop_pre_header
      _
    $region3: #{tpu_custom_call.1} parent=1 // loop_header
      %s12 = sphi 0, %s16
      %p13 = scmp.ge.s32.totalorder %s12, 4
      %s22 = sphi 0, %s24
      %s25 = sphi 0, %s22
      %s26 = sphi 0, %s25
      %s42 = sphi 0, %s26
      %s46 = sphi 0, %s46
      %s48 = sphi 0, %s46
      %s49 = sphi 0, %s48
      %s63 = sphi 0, %s49
      %s67 = sphi 0, %s67
      %s69 = sphi 0, %s67
      %s70 = sphi 0, %s69
      %s84 = sphi 0, %s70
      %s90 = sphi 0, %s92
      %s93 = sphi 0, %s90
      %s94 = sphi 0, %s93
      %s110 = sphi 0, %s94
    $region4: #{tpu_custom_call.1} parent=1 // loop_header_branch
      %15 = sbr.rel (%p13) target = $region8
    $region5: #{tpu_custom_call.1} parent=1 // loop_body
      %s17 = ssub.s32 %s12, 1
      %s18 = ssub.s32 %s12, 2
      %s19 = sadd.s32 %s12, 1
      %s20 = ssub.s32 %s12, %s19
      %p21 = scmp.eq.s32.totalorder %s20, 0
      %s23 = sadd.s32 %s22, 1
      %s24 = scalar_select %p21, %s22, %s23
      %p27 = pneg %p21
      %p28 = scmp.eq.s32.totalorder %s12, 1
      %p29 = por %p27, %p28
      %p30 = scmp.ne.s32.totalorder %s22, %s25
      %p31 = scmp.eq.s32.totalorder %s12, 0
      %p32 = por %p30, %p31
      %p33 = scmp.ne.s32.totalorder %s22, %s25
      %p34 = scmp.eq.s32.totalorder %s17, 1
      %p35 = por %p33, %p34
      %p36 = scmp.ne.s32.totalorder %s25, %s26
      %p37 = scmp.eq.s32.totalorder %s17, 0
      %p38 = por %p36, %p37
      %p39 = scmp.ne.s32.totalorder %s25, %s26
      %p40 = scmp.eq.s32.totalorder %s18, 1
      %p41 = por %p39, %p40
      %p43 = scmp.ne.s32.totalorder %s26, %s42
      %p44 = scmp.eq.s32.totalorder %s18, 0
      %p45 = por %p43, %p44
      %s47 = sadd.s32 %s46, 1
      %p50 = scmp.eq.s32.totalorder %s12, 1
      %p51 = scmp.ne.s32.totalorder %s46, %s48
      %p52 = scmp.eq.s32.totalorder %s12, 0
      %p53 = por %p51, %p52
      %p54 = scmp.ne.s32.totalorder %s46, %s48
      %p55 = scmp.eq.s32.totalorder %s17, 1
      %p56 = por %p54, %p55
      %p57 = scmp.ne.s32.totalorder %s48, %s49
      %p58 = scmp.eq.s32.totalorder %s17, 0
      %p59 = por %p57, %p58
      %p60 = scmp.ne.s32.totalorder %s48, %s49
      %p61 = scmp.eq.s32.totalorder %s18, 1
      %p62 = por %p60, %p61
      %p64 = scmp.ne.s32.totalorder %s49, %s63
      %p65 = scmp.eq.s32.totalorder %s18, 0
      %p66 = por %p64, %p65
      %s68 = sadd.s32 %s67, 1
      %p71 = scmp.eq.s32.totalorder %s12, 1
      %p72 = scmp.ne.s32.totalorder %s67, %s69
      %p73 = scmp.eq.s32.totalorder %s12, 0
      %p74 = por %p72, %p73
      %p75 = scmp.ne.s32.totalorder %s67, %s69
      %p76 = scmp.eq.s32.totalorder %s17, 1
      %p77 = por %p75, %p76
      %p78 = scmp.ne.s32.totalorder %s69, %s70
      %p79 = scmp.eq.s32.totalorder %s17, 0
      %p80 = por %p78, %p79
      %p81 = scmp.ne.s32.totalorder %s69, %s70
      %p82 = scmp.eq.s32.totalorder %s18, 1
      %p83 = por %p81, %p82
      %p85 = scmp.ne.s32.totalorder %s70, %s84
      %p86 = scmp.eq.s32.totalorder %s18, 0
      %p87 = por %p85, %p86
      %s88 = ssub.s32 %s12, %s19
      %p89 = scmp.eq.s32.totalorder %s88, 0
      %s91 = sadd.s32 %s90, 1
      %s92 = scalar_select %p89, %s90, %s91
      %p95 = pneg %p89
      %p96 = scmp.eq.s32.totalorder %s12, 1
      %p97 = por %p95, %p96
      %p98 = scmp.ne.s32.totalorder %s90, %s93
      %p99 = scmp.eq.s32.totalorder %s12, 0
      %p100 = por %p98, %p99
      %p101 = scmp.ne.s32.totalorder %s90, %s93
      %p102 = scmp.eq.s32.totalorder %s17, 1
      %p103 = por %p101, %p102
      %p104 = scmp.ne.s32.totalorder %s93, %s94
      %p105 = scmp.eq.s32.totalorder %s17, 0
      %p106 = por %p104, %p105
      %p107 = scmp.ne.s32.totalorder %s93, %s94
      %p108 = scmp.eq.s32.totalorder %s18, 1
      %p109 = por %p107, %p108
      %p111 = scmp.ne.s32.totalorder %s94, %s110
      %p112 = scmp.eq.s32.totalorder %s18, 0
      %p113 = por %p111, %p112
      %p114 = scmp.le.s32.totalorder 1, %s12
      %p115 = scmp.lt.s32.totalorder %s12, 3
      %p116 = pnand %p114, %p115
      %p117 = pneg %p116
      // Predicated region
      $region9: #{tpu_custom_call.1} parent=5 // pred_check
        _
      $region10: #{tpu_custom_call.1} parent=5 // pred_check_branch
        %119 = sbr.rel (%p116) target = $region12
      $region11: #{tpu_custom_call.1} parent=5 // pred_region
        %s120 = ssub.s32 %s12, 1
        // Predicated region
        $region13: #{tpu_custom_call.1} parent=11 // pred_check
          %p121 = pneg %p59
        $region14: #{tpu_custom_call.1} parent=11 // pred_check_branch
          %123 = sbr.rel (%p121) target = $region16
        $region15: #{tpu_custom_call.1} parent=11 // pred_region
          _
        $region16: #{tpu_custom_call.1} parent=11 // pred_fallthru
          _
        // Predicated region
        $region17: #{tpu_custom_call.1} parent=11 // pred_check
          %p124 = pneg %p80
        $region18: #{tpu_custom_call.1} parent=11 // pred_check_branch
          %126 = sbr.rel (%p124) target = $region20
        $region19: #{tpu_custom_call.1} parent=11 // pred_region
          _
        $region20: #{tpu_custom_call.1} parent=11 // pred_fallthru
          _
      $region12: #{tpu_custom_call.1} parent=5 // pred_fallthru
        _
      %p127 = scmp.lt.s32.totalorder %s12, 2
      // Predicated region
      $region21: #{tpu_custom_call.1} parent=5 // pred_check
        %p128 = pneg %p127
      $region22: #{tpu_custom_call.1} parent=5 // pred_check_branch
        %130 = sbr.rel (%p128) target = $region24
      $region23: #{tpu_custom_call.1} parent=5 // pred_region
        // Predicated region
        $region25: #{tpu_custom_call.1} parent=23 // pred_check
          %p131 = pneg %p32
        $region26: #{tpu_custom_call.1} parent=23 // pred_check_branch
          %133 = sbr.rel (%p131) target = $region28
        $region27: #{tpu_custom_call.1} parent=23 // pred_region
          %p134 = scmp.lt.s32.totalorder %s12, 1
          %s135 = scalar_select %p134, %s12, 1
          %s136 = smul.addr %s135, 8
          %s137 = scalar_lea.vmem %s0, %s136
        $region28: #{tpu_custom_call.1} parent=23 // pred_fallthru
          _
      $region24: #{tpu_custom_call.1} parent=5 // pred_fallthru
        _
      %p138 = scmp.le.s32.totalorder 1, %s12
      %p139 = scmp.lt.s32.totalorder %s12, 3
      %p140 = pnand %p138, %p139
      %p141 = pneg %p140
      // Predicated region
      $region29: #{tpu_custom_call.1} parent=5 // pred_check
        _
      $region30: #{tpu_custom_call.1} parent=5 // pred_check_branch
        %143 = sbr.rel (%p140) target = $region32
      $region31: #{tpu_custom_call.1} parent=5 // pred_region
        %s144 = ssub.s32 %s12, 1
        %p145 = scmp.lt.s32.totalorder %s17, 1
        %s146 = scalar_select %p145, %s17, 1
        %s147 = smul.addr %s146, 8
        %s148 = scalar_lea.vmem %s0, %s147
        %p149 = pneg %p38
        %p150 = pneg %p35
        %p151 = pneg %p59
        %p152 = pneg %p56
        %p153 = pneg %p80
        %p154 = pneg %p77
        %p155 = pneg %p106
        %p156 = pneg %p103
        %s157 = sand.u32 %s93, 1
        %s158 = scalar_lea.sflag [#allocation3], %s157
        %s159 = sand.u32 %s93, 1
        %s160 = smul.addr %s159, 8
        %s161 = scalar_lea.vmem [#allocation2], %s160
        %p162 = scmp.lt.s32.totalorder %s17, 1
        %s163 = scalar_select %p162, %s17, 1
        %s164 = smul.addr %s163, 8
        %s165 = scalar_lea.vmem %s0, %s164
        %v166 = vld [vmem:[%s165] sm:$0xff]
        %v167 = vld [vmem:[%s1] sm:$0xff]
        %v168 = vld [vmem:[%s1 + $0x8] sm:$0xff]
        %v169 = vld [vmem:[%s1 + $0x10] sm:$0xff]
        %v170 = vld [vmem:[%s1 + $0x18] sm:$0xff]
        %vm171 = vcmask 261120
        %v173 = vsel %vm171, %v166, 0
        %175 = vmatprep.subr.mxu0 0.0
        %176 = vmatpush1.msra.mxu0 %v167
        %177 = vmatprep.subr.mxu0 0.0
        %178 = vmatpush1.msra.mxu0 %v168
        %179 = vmatprep.subr.mxu0 0.0
        %180 = vmatpush1.msra.mxu0 %v169
        %181 = vmatprep.subr.mxu0 0.0
        %182 = vmatpush1.msra.mxu0 %v170
        %183 = vmatprep.subr.mxu0 0.0
        %184 = vmatpush1.msra.mxu0 0.0
        %185 = vmatprep.subr.mxu0 0.0
        %186 = vmatpush1.msra.mxu0 0.0
        %187 = vmatprep.subr.mxu0 0.0
        %188 = vmatpush1.msra.mxu0 0.0
        %189 = vmatprep.subr.mxu0 0.0
        %190 = vmatpush1.msra.mxu0 0.0
        %191 = vmatprep.subr.mxu0 0.0
        %192 = vmatpush1.msra.mxu0 0.0
        %193 = vmatprep.subr.mxu0 0.0
        %194 = vmatpush1.msra.mxu0 0.0
        %195 = vmatprep.subr.mxu0 0.0
        %196 = vmatpush1.msra.mxu0 0.0
        %197 = vmatprep.subr.mxu0 0.0
        %198 = vmatpush1.msra.mxu0 0.0
        %199 = vmatprep.subr.mxu0 0.0
        %200 = vmatpush1.msra.mxu0 0.0
        %201 = vmatprep.subr.mxu0 0.0
        %202 = vmatpush1.msra.mxu0 0.0
        %203 = vmatprep.subr.mxu0 0.0
        %204 = vmatpush1.msra.mxu0 0.0
        %205 = vmatprep.subr.mxu0 0.0
        %206 = vmatpush1.msra.mxu0 0.0
        %207 = vmatprep.subr.mxu0 0.0
        %208 = vmatpush1.msra.mxu0 0.0
        %209 = vmatprep.subr.mxu0 0.0
        %210 = vmatpush1.msra.mxu0 0.0
        %211 = vmatprep.subr.mxu0 0.0
        %212 = vmatpush1.msra.mxu0 0.0
        %213 = vmatprep.subr.mxu0 0.0
        %214 = vmatpush1.msra.mxu0 0.0
        %215 = vmatprep.subr.mxu0 0.0
        %216 = vmatpush1.msra.mxu0 0.0
        %217 = vmatprep.subr.mxu0 0.0
        %218 = vmatpush1.msra.mxu0 0.0
        %219 = vmatprep.subr.mxu0 0.0
        %220 = vmatpush1.msra.mxu0 0.0
        %221 = vmatprep.subr.mxu0 0.0
        %222 = vmatpush1.msra.mxu0 0.0
        %223 = vmatprep.subr.mxu0 0.0
        %224 = vmatpush1.msra.mxu0 0.0
        %225 = vmatprep.subr.mxu0 0.0
        %226 = vmatpush1.msra.mxu0 0.0
        %227 = vmatprep.subr.mxu0 0.0
        %228 = vmatpush1.msra.mxu0 0.0
        %229 = vmatprep.subr.mxu0 0.0
        %230 = vmatpush1.msra.mxu0 0.0
        %231 = vmatprep.subr.mxu0 0.0
        %232 = vmatpush1.msra.mxu0 0.0
        %233 = vmatprep.subr.mxu0 0.0
        %234 = vmatpush1.msra.mxu0 0.0
        %235 = vmatprep.subr.mxu0 0.0
        %236 = vmatpush1.msra.mxu0 0.0
        %237 = vmatprep.subr.mxu0 0.0
        %238 = vmatpush1.msra.mxu0 0.0
        %239 = vmatprep.mubr.f32.mxu0 0.0
        %240 = vmatmul.mubr.f32.gmra.mrb[0].mxu0 %v173
        %v241 = vpop.f32.mrb[0].mxu0
        %v242 = vadd.f32 0.0, %v241
        %v243 = vpop.f32.mrb[0].mxu0
        %244 = vdwg.mxu0
        %v245 = vld [vmem:[%s2] sm:$0xf]
        %247 = vset.pattern.permute.xlu0 0
        %248 = vperm.xlu0 %247, %v242
        %v249 = vpop.permute.xlu0 %248
        %v251 = vlaneseq
        %v252 = vshrl.u32 %v251, 7
        %v253 = vsub.s32 0, %v252
        %v254 = vrot.slane %v245, %v253
        %v255 = vmul.f32 %v249, %v254
        %256 = vset.pattern.permute.xlu0 1
        %257 = vperm.xlu0 %256, %v242
        %v258 = vpop.permute.xlu0 %257
        %v260 = vlaneseq
        %v261 = vshrl.u32 %v260, 7
        %v262 = vsub.s32 1, %v261
        %v263 = vrot.slane %v245, %v262
        %v264 = vmul.f32 %v258, %v263
        %v265 = vadd.f32 %v255, %v264
        %266 = vset.pattern.permute.xlu0 2
        %267 = vperm.xlu0 %266, %v242
        %v268 = vpop.permute.xlu0 %267
        %v270 = vlaneseq
        %v271 = vshrl.u32 %v270, 7
        %v272 = vsub.s32 2, %v271
        %v273 = vrot.slane %v245, %v272
        %v274 = vmul.f32 %v268, %v273
        %v275 = vadd.f32 %v265, %v274
        %276 = vset.pattern.permute.xlu0 3
        %277 = vperm.xlu0 %276, %v242
        %v278 = vpop.permute.xlu0 %277
        %v280 = vlaneseq
        %v281 = vshrl.u32 %v280, 7
        %v282 = vsub.s32 3, %v281
        %v283 = vrot.slane %v245, %v282
        %v284 = vmul.f32 %v278, %v283
        %v285 = vadd.f32 %v275, %v284
        %286 = vst.msk [vmem:[%s161] sm:$0xff] %vm171, %v285
        %s287 = sand.u32 %s93, 1
        %s288 = scalar_lea.sflag [#allocation3], %s287
        %s289 = sand.u32 %s93, 1
        %s290 = smul.addr %s289, 8
        %s291 = scalar_lea.vmem [#allocation2], %s290
        // Predicated region
        $region33: #{tpu_custom_call.1} parent=31 // pred_check
          %p292 = pneg %p103
        $region34: #{tpu_custom_call.1} parent=31 // pred_check_branch
          %294 = sbr.rel (%p292) target = $region36
        $region35: #{tpu_custom_call.1} parent=31 // pred_region
          %s296 = ssub.s32 128, 128
          %297 = vsyncadd %s288, %s296
          %s298 = smul.addr %s17, 128
          %s299 = scalar_lea.hbm %s3, %s298
          %s301 = sshll.u32 %s291, 4
          %s302 = int_to_ptr.vmem [resolvable:$true] %s301
          %304 = dma.vmem_to_hbm [thread:$0]  %s302, 128, %s299, %s288
        $region36: #{tpu_custom_call.1} parent=31 // pred_fallthru
          _
      $region32: #{tpu_custom_call.1} parent=5 // pred_fallthru
        _
      %p305 = scmp.le.s32.totalorder 2, %s12
      // Predicated region
      $region37: #{tpu_custom_call.1} parent=5 // pred_check
        %p306 = pneg %p305
      $region38: #{tpu_custom_call.1} parent=5 // pred_check_branch
        %308 = sbr.rel (%p306) target = $region40
      $region39: #{tpu_custom_call.1} parent=5 // pred_region
        %s309 = ssub.s32 %s12, 2
        // Predicated region
        $region41: #{tpu_custom_call.1} parent=39 // pred_check
          %p310 = pneg %p109
        $region42: #{tpu_custom_call.1} parent=39 // pred_check_branch
          %312 = sbr.rel (%p310) target = $region44
        $region43: #{tpu_custom_call.1} parent=39 // pred_region
          %s313 = sand.u32 %s94, 1
          %s314 = scalar_lea.sflag [#allocation3], %s313
          %s315 = sand.u32 %s94, 1
          %s316 = smul.addr %s315, 8
          %s317 = scalar_lea.vmem [#allocation2], %s316
          %318 = dma.done %s314, 128
        $region44: #{tpu_custom_call.1} parent=39 // pred_fallthru
          _
      $region40: #{tpu_custom_call.1} parent=5 // pred_fallthru
        _
    $region6: #{tpu_custom_call.1} parent=1 // loop_footer
      %s16 = sadd.s32 1, %s12
    $region7: #{tpu_custom_call.1} parent=1 // loop_footer_branch
      %11 = sbr.rel target = $region3
    $region8: #{tpu_custom_call.1} parent=1 // loop_exit
      _
    %319 = vsyncpa [#allocation3], 1
    %s320 = scalar_lea.sflag [#allocation3], 1
    %321 = vsyncpa %s320, 1

</llo_original>
